<compile_context>
chip_gen: v5e
topology: v5e:2x2
jax: 0.10.0
libtpu: 0.0.40
codegen_flags: <defaults>
</compile_context>

<pallas_src>
import functools
import math

import jax
import jax.numpy as jnp
from jax import lax
from jax.experimental import pallas as pl
from jax.experimental.pallas import tpu as pltpu


_VMEM = pl.BlockSpec(memory_space=pltpu.MemorySpace.VMEM)


# ----------------------------------------------------------------------------
# Fused Pallas kernel
# ----------------------------------------------------------------------------
def _fused_kernel(a1_ref, a2_ref, x_ref, dinv1_ref, dinv2_ref,
                  wgcn_ref, wagg_ref, bias_ref, o_ref,
                  h_scr, gg_scr,
                  *, batch, num_nodes, node_dim, group_lists):
    f32 = jnp.float32
    bf16 = jnp.bfloat16
    D = node_dim
    B = batch
    G = len(group_lists)

    # ---- lower GCN: dinv*(A@(dinv*XW) + dinv*XW) + b  (== D^-1/2(A+I)D^-1/2 XW + b)
    dinv1 = dinv1_ref[...]                                   # (B*num_nodes, 1) f32
    wl = wgcn_ref[0:D, :]                                    # (D, D) bf16
    bl = bias_ref[0:1, :]                                    # (1, D) f32
    xw = jnp.dot(x_ref[...].astype(bf16), wl, preferred_element_type=f32)
    y = dinv1 * xw
    ay = jnp.dot(a1_ref[...], y.astype(bf16), preferred_element_type=f32)
    h = dinv1 * (ay + y) + bl                                # (B*num_nodes, D) f32
    h_scr[...] = h

    # ---- per-group aggregation Linears --------------------------------------
    # group_x[b, g, :] = b_g + sum_j h[b*num_nodes + n_{g,j}, :] @ W_g[j]
    # The x[n::num_nodes] gather is a sublane-strided ref load; results are
    # stored GROUP-MAJOR (row = g*B + b) so every store is a contiguous block.
    p = 0
    for g, nodes in enumerate(group_lists):
        acc = jnp.zeros((B, D), f32)
        for n in nodes:
            h_n = h_scr[pl.ds(n, B, stride=num_nodes), :]    # (B, D) f32
            w_blk = wagg_ref[p * D:(p + 1) * D, :]           # (D, D) bf16
            acc = acc + jnp.dot(h_n.astype(bf16), w_blk,
                                preferred_element_type=f32)
            p += 1
        gg_scr[g * B:(g + 1) * B, :] = acc + bias_ref[2 + g:3 + g, :]

    # ---- group-major -> batch-major (row = b*G + g) via strided loads --------
    gx = jnp.concatenate(
        [gg_scr[pl.ds(b, G, stride=B), :] for b in range(B)], axis=0)

    # ---- upper GCN ------------------------------------------------------------
    dinv2 = dinv2_ref[...]                                   # (B*G, 1) f32
    wu = wgcn_ref[D:2 * D, :]                                # (D, D) bf16
    bu = bias_ref[1:2, :]                                    # (1, D) f32
    gw = jnp.dot(gx.astype(bf16), wu, preferred_element_type=f32)
    y2 = dinv2 * gw
    ay2 = jnp.dot(a2_ref[...], y2.astype(bf16), preferred_element_type=f32)
    o_ref[...] = (dinv2 * (ay2 + y2) + bu).astype(o_ref.dtype)


# ----------------------------------------------------------------------------
# HierarchicalGCN module (parameters + forward)
# ----------------------------------------------------------------------------
class HierarchicalGCN:
    def __init__(self, group2nodes, num_nodes, node_dim, key):
        self.group2nodes = {g: list(nodes) for g, nodes in group2nodes.items()}
        self.group_lists = tuple(tuple(n) for n in self.group2nodes.values())
        self.num_nodes = num_nodes
        self.node_dim = node_dim
        self.num_groups = len(self.group_lists)

        keys = jax.random.split(key, 4 + 2 * self.num_groups)
        s = 1.0 / math.sqrt(node_dim)

        def unif(k, shape, scale):
            return jax.random.uniform(k, shape, jnp.float32, -scale, scale)

        # raw f32 parameters (also used by the pure-JAX reference)
        self.w_lower = unif(keys[0], (node_dim, node_dim), s)
        self.b_lower = unif(keys[1], (1, node_dim), s)
        self.w_upper = unif(keys[2], (node_dim, node_dim), s)
        self.b_upper = unif(keys[3], (1, node_dim), s)
        self.agg_w, self.agg_b = [], []            # stored transposed: (in, out)
        for gi, nodes in enumerate(self.group_lists):
            d_in = node_dim * len(nodes)
            sg = 1.0 / math.sqrt(d_in)
            self.agg_w.append(unif(keys[4 + 2 * gi], (d_in, node_dim), sg))
            self.agg_b.append(unif(keys[5 + 2 * gi], (1, node_dim), sg))

        # ---- packed / bf16 kernel parameters ----------------------------------
        # w_gcn : rows [0:D] = lower-GCN weight, [D:2D] = upper-GCN weight.
        self.w_gcn = jnp.concatenate(
            [self.w_lower, self.w_upper], axis=0).astype(jnp.bfloat16)
        # w_agg : all per-(group, member) (D, D) blocks, (group outer, member inner).
        self.w_agg = jnp.concatenate(self.agg_w, axis=0).astype(jnp.bfloat16)
        # biases: row 0 = lower GCN, row 1 = upper GCN, rows 2+g = group g's Linear.
        self.b_slab = jnp.concatenate(
            [self.b_lower, self.b_upper] + self.agg_b, axis=0)

    def __call__(self, x, A1, A2):
        batch = x.shape[0] // self.num_nodes
        n1 = batch * self.num_nodes
        n2 = batch * self.num_groups
        D = self.node_dim

        # Degree normalisation in the wrapper (XLA fuses with the bf16 casts):
        # dinv = (rowsum(A) + 1)^{-1/2}  ==  D_hat^{-1/2} for A_hat = A + I.
        dinv1 = lax.rsqrt(jnp.sum(A1, axis=1, keepdims=True) + 1.0)
        dinv2 = lax.rsqrt(jnp.sum(A2, axis=1, keepdims=True) + 1.0)

        kernel = functools.partial(
            _fused_kernel, batch=batch, num_nodes=self.num_nodes,
            node_dim=D, group_lists=self.group_lists)

        # TODO(synk): for large graphs add a (row, K) grid over A1 with an f32
        # accumulator, dimension_semantics=("parallel","arbitrary") and a
        # per-generation vmem_limit_bytes; single VMEM block at demo scale.
        return pl.pallas_call(
            kernel,
            out_shape=jax.ShapeDtypeStruct((n2, D), jnp.float32),
            in_specs=[_VMEM] * 8,
            out_specs=_VMEM,
            scratch_shapes=[
                pltpu.VMEM((n1, D), jnp.float32),   # lower-GCN output h
                pltpu.VMEM((n2, D), jnp.float32),   # group-major aggregation out
            ],
        )(A1.astype(jnp.bfloat16), A2.astype(jnp.bfloat16), x,
          dinv1, dinv2, self.w_gcn, self.w_agg, self.b_slab)


# ----------------------------------------------------------------------------
# Pure-JAX reference for sanity checking
# ----------------------------------------------------------------------------
def _gcn_ref(a, x, w, b):
    a_hat = a + jnp.eye(a.shape[0], dtype=a.dtype)
    dinv = 1.0 / jnp.sqrt(jnp.sum(a_hat, axis=1, keepdims=True))
    a_norm = dinv * a_hat * dinv.T
    return a_norm @ (x @ w) + b


def _forward_ref(model, x, A1, A2):
    x = _gcn_ref(A1, x, model.w_lower, model.b_lower)
    batch = x.shape[0] // model.num_nodes
    x_bn = x.reshape(batch, model.num_nodes, model.node_dim)
    gx = []
    for gi, nodes in enumerate(model.group_lists):
        nx = x_bn[:, jnp.array(list(nodes)), :].reshape(batch, -1)
        gx.append(nx @ model.agg_w[gi] + model.agg_b[gi])
    gx = jnp.stack(gx, axis=1).reshape(-1, model.node_dim)
    return _gcn_ref(A2, gx, model.w_upper, model.b_upper)


# ----------------------------------------------------------------------------
if __name__ == "__main__":
    key = jax.random.PRNGKey(0)
    k_param, k_x, k_a1, k_a2 = jax.random.split(key, 4)

    batch = 2
    num_nodes = 4
    node_dim = 32
    group2nodes = {0: [0, 1], 1: [2, 3]}          # 2 groups of 2 nodes each
    num_groups = len(group2nodes)

    N1 = batch * num_nodes                         # 8
    N2 = batch * num_groups                        # 4

    model = HierarchicalGCN(group2nodes, num_nodes, node_dim, k_param)

    x = jax.random.normal(k_x, (N1, node_dim), jnp.float32)
    # symmetric 0/1 adjacency matrices (no self loops; normalisation adds them)
    a1 = (jax.random.uniform(k_a1, (N1, N1)) > 0.5).astype(jnp.float32)
    A1 = jnp.triu(a1, 1) + jnp.triu(a1, 1).T
    a2 = (jax.random.uniform(k_a2, (N2, N2)) > 0.5).astype(jnp.float32)
    A2 = jnp.triu(a2, 1) + jnp.triu(a2, 1).T

    out = model(x, A1, A2)
    out = jax.block_until_ready(out)

    ref = _forward_ref(model, x, A1, A2)
    assert out.shape == (N2, node_dim)
    # bf16 MXU feed (f32 accumulation) -> wider tolerance than the pure-f32 path.
    assert jnp.allclose(out, ref, atol=5e-2, rtol=5e-2), "mismatch vs JAX reference"

    print("KERNEL_OK")
</pallas_src>

<mosaic_0001>
module attributes {stable_mosaic.version = 11 : i64} {
  func.func @_fused_kernel(%arg0: memref<8x8xbf16, #tpu.memory_space<vmem>>, %arg1: memref<4x4xbf16, #tpu.memory_space<vmem>>, %arg2: memref<8x32xf32, #tpu.memory_space<vmem>>, %arg3: memref<8x1xf32, #tpu.memory_space<vmem>>, %arg4: memref<4x1xf32, #tpu.memory_space<vmem>>, %arg5: memref<64x32xbf16, #tpu.memory_space<vmem>>, %arg6: memref<128x32xbf16, #tpu.memory_space<vmem>>, %arg7: memref<4x32xf32, #tpu.memory_space<vmem>>, %arg8: memref<4x32xf32, #tpu.memory_space<vmem>>, %arg9: memref<8x32xf32, #tpu.memory_space<vmem>>, %arg10: memref<4x32xf32, #tpu.memory_space<vmem>>) attributes {dimension_semantics = [], scalar_prefetch = 0 : i64, scratch_operands = 2 : i64, tpu.core_type = #tpu.core_type<tc>} {
    %c0 = arith.constant 0 : index
    %c0_0 = arith.constant 0 : index
    %0 = vector.load %arg3[%c0, %c0_0] : memref<8x1xf32, #tpu.memory_space<vmem>>, vector<8x1xf32>
    %c0_1 = arith.constant 0 : index
    %c0_2 = arith.constant 0 : index
    %1 = vector.load %arg5[%c0_1, %c0_2] : memref<64x32xbf16, #tpu.memory_space<vmem>>, vector<32x32xbf16>
    %c0_3 = arith.constant 0 : index
    %c0_4 = arith.constant 0 : index
    %2 = vector.load %arg7[%c0_3, %c0_4] : memref<4x32xf32, #tpu.memory_space<vmem>>, vector<1x32xf32>
    %c0_5 = arith.constant 0 : index
    %c0_6 = arith.constant 0 : index
    %3 = vector.load %arg2[%c0_5, %c0_6] : memref<8x32xf32, #tpu.memory_space<vmem>>, vector<8x32xf32>
    %4 = arith.truncf %3 : vector<8x32xf32> to vector<8x32xbf16>
    %cst = arith.constant dense<0.000000e+00> : vector<8x32xf32>
    %5 = tpu.matmul %4, %1, %cst {dimension_numbers = #tpu.dot_dimension_numbers<[1], [0], [0], [1], [0, 0, 1, 1], [], []>} : vector<8x32xbf16>, vector<32x32xbf16>, vector<8x32xf32> -> vector<8x32xf32>
    %6 = vector.broadcast %0 : vector<8x1xf32> to vector<8x32xf32>
    %7 = arith.mulf %6, %5 : vector<8x32xf32>
    %c0_7 = arith.constant 0 : index
    %c0_8 = arith.constant 0 : index
    %8 = vector.load %arg0[%c0_7, %c0_8] : memref<8x8xbf16, #tpu.memory_space<vmem>>, vector<8x8xbf16>
    %9 = arith.truncf %7 : vector<8x32xf32> to vector<8x32xbf16>
    %cst_9 = arith.constant dense<0.000000e+00> : vector<8x32xf32>
    %10 = tpu.matmul %8, %9, %cst_9 {dimension_numbers = #tpu.dot_dimension_numbers<[1], [0], [0], [1], [0, 0, 1, 1], [], []>} : vector<8x8xbf16>, vector<8x32xbf16>, vector<8x32xf32> -> vector<8x32xf32>
    %11 = arith.addf %10, %7 : vector<8x32xf32>
    %12 = vector.broadcast %0 : vector<8x1xf32> to vector<8x32xf32>
    %13 = arith.mulf %12, %11 : vector<8x32xf32>
    %14 = vector.broadcast %2 : vector<1x32xf32> to vector<8x32xf32>
    %15 = arith.addf %13, %14 : vector<8x32xf32>
    %c0_10 = arith.constant 0 : index
    %c0_11 = arith.constant 0 : index
    %16 = vector.load %arg9[%c0_10, %c0_11] : memref<8x32xf32, #tpu.memory_space<vmem>>, vector<8x32xf32>
    tpu.vector_store %arg9[%c0_10, %c0_11], %15 {strides = array<i32>} : memref<8x32xf32, #tpu.memory_space<vmem>>, vector<8x32xf32>,
    %cst_12 = arith.constant 0.000000e+00 : f32
    %17 = vector.broadcast %cst_12 : f32 to vector<2x32xf32>
    %c0_13 = arith.constant 0 : index
    %c0_14 = arith.constant 0 : index
    %18 = tpu.strided_load %arg9[%c0_13, %c0_14] {strides = array<i32: 4, 1>} : memref<8x32xf32, #tpu.memory_space<vmem>>, vector<2x32xf32>
    %c0_15 = arith.constant 0 : index
    %c0_16 = arith.constant 0 : index
    %19 = vector.load %arg6[%c0_15, %c0_16] : memref<128x32xbf16, #tpu.memory_space<vmem>>, vector<32x32xbf16>
    %20 = arith.truncf %18 : vector<2x32xf32> to vector<2x32xbf16>
    %cst_17 = arith.constant dense<0.000000e+00> : vector<2x32xf32>
    %21 = tpu.matmul %20, %19, %cst_17 {dimension_numbers = #tpu.dot_dimension_numbers<[1], [0], [0], [1], [0, 0, 1, 1], [], []>} : vector<2x32xbf16>, vector<32x32xbf16>, vector<2x32xf32> -> vector<2x32xf32>
    %22 = arith.addf %17, %21 : vector<2x32xf32>
    %c1 = arith.constant 1 : index
    %c0_18 = arith.constant 0 : index
    %23 = tpu.strided_load %arg9[%c1, %c0_18] {strides = array<i32: 4, 1>} : memref<8x32xf32, #tpu.memory_space<vmem>>, vector<2x32xf32>
    %c32 = arith.constant 32 : index
    %c0_19 = arith.constant 0 : index
    %24 = vector.load %arg6[%c32, %c0_19] : memref<128x32xbf16, #tpu.memory_space<vmem>>, vector<32x32xbf16>
    %25 = arith.truncf %23 : vector<2x32xf32> to vector<2x32xbf16>
    %cst_20 = arith.constant dense<0.000000e+00> : vector<2x32xf32>
    %26 = tpu.matmul %25, %24, %cst_20 {dimension_numbers = #tpu.dot_dimension_numbers<[1], [0], [0], [1], [0, 0, 1, 1], [], []>} : vector<2x32xbf16>, vector<32x32xbf16>, vector<2x32xf32> -> vector<2x32xf32>
    %27 = arith.addf %22, %26 : vector<2x32xf32>
    %c2 = arith.constant 2 : index
    %c0_21 = arith.constant 0 : index
    %28 = vector.load %arg7[%c2, %c0_21] : memref<4x32xf32, #tpu.memory_space<vmem>>, vector<1x32xf32>
    %29 = vector.broadcast %28 : vector<1x32xf32> to vector<2x32xf32>
    %30 = arith.addf %27, %29 : vector<2x32xf32>
    %c0_22 = arith.constant 0 : index
    %c0_23 = arith.constant 0 : index
    %31 = vector.load %arg10[%c0_22, %c0_23] : memref<4x32xf32, #tpu.memory_space<vmem>>, vector<2x32xf32>
    tpu.vector_store %arg10[%c0_22, %c0_23], %30 {strides = array<i32>} : memref<4x32xf32, #tpu.memory_space<vmem>>, vector<2x32xf32>,
    %cst_24 = arith.constant 0.000000e+00 : f32
    %32 = vector.broadcast %cst_24 : f32 to vector<2x32xf32>
    %c2_25 = arith.constant 2 : index
    %c0_26 = arith.constant 0 : index
    %33 = tpu.strided_load %arg9[%c2_25, %c0_26] {strides = array<i32: 4, 1>} : memref<8x32xf32, #tpu.memory_space<vmem>>, vector<2x32xf32>
    %c64 = arith.constant 64 : index
    %c0_27 = arith.constant 0 : index
    %34 = vector.load %arg6[%c64, %c0_27] : memref<128x32xbf16, #tpu.memory_space<vmem>>, vector<32x32xbf16>
    %35 = arith.truncf %33 : vector<2x32xf32> to vector<2x32xbf16>
    %cst_28 = arith.constant dense<0.000000e+00> : vector<2x32xf32>
    %36 = tpu.matmul %35, %34, %cst_28 {dimension_numbers = #tpu.dot_dimension_numbers<[1], [0], [0], [1], [0, 0, 1, 1], [], []>} : vector<2x32xbf16>, vector<32x32xbf16>, vector<2x32xf32> -> vector<2x32xf32>
    %37 = arith.addf %32, %36 : vector<2x32xf32>
    %c3 = arith.constant 3 : index
    %c0_29 = arith.constant 0 : index
    %38 = tpu.strided_load %arg9[%c3, %c0_29] {strides = array<i32: 4, 1>} : memref<8x32xf32, #tpu.memory_space<vmem>>, vector<2x32xf32>
    %c96 = arith.constant 96 : index
    %c0_30 = arith.constant 0 : index
    %39 = vector.load %arg6[%c96, %c0_30] : memref<128x32xbf16, #tpu.memory_space<vmem>>, vector<32x32xbf16>
    %40 = arith.truncf %38 : vector<2x32xf32> to vector<2x32xbf16>
    %cst_31 = arith.constant dense<0.000000e+00> : vector<2x32xf32>
    %41 = tpu.matmul %40, %39, %cst_31 {dimension_numbers = #tpu.dot_dimension_numbers<[1], [0], [0], [1], [0, 0, 1, 1], [], []>} : vector<2x32xbf16>, vector<32x32xbf16>, vector<2x32xf32> -> vector<2x32xf32>
    %42 = arith.addf %37, %41 : vector<2x32xf32>
    %c3_32 = arith.constant 3 : index
    %c0_33 = arith.constant 0 : index
    %43 = vector.load %arg7[%c3_32, %c0_33] : memref<4x32xf32, #tpu.memory_space<vmem>>, vector<1x32xf32>
    %44 = vector.broadcast %43 : vector<1x32xf32> to vector<2x32xf32>
    %45 = arith.addf %42, %44 : vector<2x32xf32>
    %c2_34 = arith.constant 2 : index
    %c0_35 = arith.constant 0 : index
    %46 = vector.load %arg10[%c2_34, %c0_35] : memref<4x32xf32, #tpu.memory_space<vmem>>, vector<2x32xf32>
    tpu.vector_store %arg10[%c2_34, %c0_35], %45 {strides = array<i32>} : memref<4x32xf32, #tpu.memory_space<vmem>>, vector<2x32xf32>,
    %c0_36 = arith.constant 0 : index
    %c0_37 = arith.constant 0 : index
    %47 = tpu.strided_load %arg10[%c0_36, %c0_37] {strides = array<i32: 2, 1>} : memref<4x32xf32, #tpu.memory_space<vmem>>, vector<2x32xf32>
    %c1_38 = arith.constant 1 : index
    %c0_39 = arith.constant 0 : index
    %48 = tpu.strided_load %arg10[%c1_38, %c0_39] {strides = array<i32: 2, 1>} : memref<4x32xf32, #tpu.memory_space<vmem>>, vector<2x32xf32>
    %49 = tpu.concatenate %47, %48 in 0 : vector<2x32xf32>, vector<2x32xf32> -> vector<4x32xf32>
    %c0_40 = arith.constant 0 : index
    %c0_41 = arith.constant 0 : index
    %50 = vector.load %arg4[%c0_40, %c0_41] : memref<4x1xf32, #tpu.memory_space<vmem>>, vector<4x1xf32>
    %c32_42 = arith.constant 32 : index
    %c0_43 = arith.constant 0 : index
    %51 = vector.load %arg5[%c32_42, %c0_43] : memref<64x32xbf16, #tpu.memory_space<vmem>>, vector<32x32xbf16>
    %c1_44 = arith.constant 1 : index
    %c0_45 = arith.constant 0 : index
    %52 = vector.load %arg7[%c1_44, %c0_45] : memref<4x32xf32, #tpu.memory_space<vmem>>, vector<1x32xf32>
    %53 = arith.truncf %49 : vector<4x32xf32> to vector<4x32xbf16>
    %cst_46 = arith.constant dense<0.000000e+00> : vector<4x32xf32>
    %54 = tpu.matmul %53, %51, %cst_46 {dimension_numbers = #tpu.dot_dimension_numbers<[1], [0], [0], [1], [0, 0, 1, 1], [], []>} : vector<4x32xbf16>, vector<32x32xbf16>, vector<4x32xf32> -> vector<4x32xf32>
    %55 = vector.broadcast %50 : vector<4x1xf32> to vector<4x32xf32>
    %56 = arith.mulf %55, %54 : vector<4x32xf32>
    %c0_47 = arith.constant 0 : index
    %c0_48 = arith.constant 0 : index
    %57 = vector.load %arg1[%c0_47, %c0_48] : memref<4x4xbf16, #tpu.memory_space<vmem>>, vector<4x4xbf16>
    %58 = arith.truncf %56 : vector<4x32xf32> to vector<4x32xbf16>
    %cst_49 = arith.constant dense<0.000000e+00> : vector<4x32xf32>
    %59 = tpu.matmul %57, %58, %cst_49 {dimension_numbers = #tpu.dot_dimension_numbers<[1], [0], [0], [1], [0, 0, 1, 1], [], []>} : vector<4x4xbf16>, vector<4x32xbf16>, vector<4x32xf32> -> vector<4x32xf32>
    %60 = arith.addf %59, %56 : vector<4x32xf32>
    %61 = vector.broadcast %50 : vector<4x1xf32> to vector<4x32xf32>
    %62 = arith.mulf %61, %60 : vector<4x32xf32>
    %63 = vector.broadcast %52 : vector<1x32xf32> to vector<4x32xf32>
    %64 = arith.addf %62, %63 : vector<4x32xf32>
    %c0_50 = arith.constant 0 : index
    %c0_51 = arith.constant 0 : index
    %65 = vector.load %arg8[%c0_50, %c0_51] : memref<4x32xf32, #tpu.memory_space<vmem>>, vector<4x32xf32>
    tpu.vector_store %arg8[%c0_50, %c0_51], %64 {strides = array<i32>} : memref<4x32xf32, #tpu.memory_space<vmem>>, vector<4x32xf32>,
    return
  }
}

</mosaic_0001>

<llo_original>
// kernel: tpu_custom_call.1
$region0: #{tpu_custom_call.1}
  #allocation0 [shape = 'u32[]', space=smem, size = 0x4, offset = 0x4, fixed_abs, tag = 'smem constant byte address 0x4 - core index']
  #allocation1 [shape = 'u32[72,128]{1,0:T(1,128)}', space=vmem, size = 0x9000, scoped, tag = 'internal scratch']
  #allocation2 [shape = 'f32[8,32]{1,0:T(8,128)}', space=vmem, size = 0x1000, scoped, tag = 'scratch operand']
  #allocation3 [shape = 'f32[4,32]{1,0:T(4,128)}', space=vmem, size = 0x800, scoped, tag = 'scratch operand']
  %s0 = inlined_call_operand.vmem [shape: bf16[8,8], index: 0, kind: input, shape index: {}]
  %s1 = inlined_call_operand.vmem [shape: bf16[4,4], index: 1, kind: input, shape index: {}]
  %s2 = inlined_call_operand.vmem [shape: f32[8,32], index: 2, kind: input, shape index: {}]
  %s3 = inlined_call_operand.vmem [shape: f32[8,1], index: 3, kind: input, shape index: {}]
  %s4 = inlined_call_operand.vmem [shape: f32[4,1], index: 4, kind: input, shape index: {}]
  %s5 = inlined_call_operand.vmem [shape: bf16[64,32], index: 5, kind: input, shape index: {}]
  %s6 = inlined_call_operand.vmem [shape: bf16[128,32], index: 6, kind: input, shape index: {}]
  %s7 = inlined_call_operand.vmem [shape: f32[4,32], index: 7, kind: input, shape index: {}]
  %s8 = inlined_call_operand.hbm [shape: f32[4,32], index: 8, kind: output, shape index: {}]
  %s9 = sld [smem:[#allocation0]]
  $region42: #{tpu_custom_call.1} parent=0
    _
  %s11 = ssub.s32 1, %s9
  %s12 = scalar_select 0, %s11, %s9
  $region1: #{tpu_custom_call.1} parent=0
    #allocation4 [shape = 'u8[2048]{0}', space=vmem, size = 0x800, scoped, tag = 'output window, operand 0, single buffered']
    #allocation5 [shape = 's32[1]{0}', space=sflag, size = 0x4, scoped, tag = 'scoped memory for tpu_custom_call.1']
    %13 = vsyncpa [#allocation5], 0
    // Predicated region
    $region2: #{tpu_custom_call.1} parent=1 // pred_check
      _
    $region3: #{tpu_custom_call.1} parent=1 // pred_check_branch
      %15 = sbr.rel (0) target = $region5
    $region4: #{tpu_custom_call.1} parent=1 // pred_region
      _
    $region5: #{tpu_custom_call.1} parent=1 // pred_fallthru
      _
    // Predicated region
    $region6: #{tpu_custom_call.1} parent=1 // pred_check
      _
    $region7: #{tpu_custom_call.1} parent=1 // pred_check_branch
      %17 = sbr.rel (0) target = $region9
    $region8: #{tpu_custom_call.1} parent=1 // pred_region
      _
    $region9: #{tpu_custom_call.1} parent=1 // pred_fallthru
      _
    // Predicated region
    $region10: #{tpu_custom_call.1} parent=1 // pred_check
      _
    $region11: #{tpu_custom_call.1} parent=1 // pred_check_branch
      %19 = sbr.rel (0) target = $region13
    $region12: #{tpu_custom_call.1} parent=1 // pred_region
      _
    $region13: #{tpu_custom_call.1} parent=1 // pred_fallthru
      _
    // Predicated region
    $region14: #{tpu_custom_call.1} parent=1 // pred_check
      _
    $region15: #{tpu_custom_call.1} parent=1 // pred_check_branch
      %21 = sbr.rel (0) target = $region17
    $region16: #{tpu_custom_call.1} parent=1 // pred_region
      _
    $region17: #{tpu_custom_call.1} parent=1 // pred_fallthru
      _
    // Predicated region
    $region18: #{tpu_custom_call.1} parent=1 // pred_check
      _
    $region19: #{tpu_custom_call.1} parent=1 // pred_check_branch
      %23 = sbr.rel (0) target = $region21
    $region20: #{tpu_custom_call.1} parent=1 // pred_region
      _
    $region21: #{tpu_custom_call.1} parent=1 // pred_fallthru
      _
    // Predicated region
    $region22: #{tpu_custom_call.1} parent=1 // pred_check
      _
    $region23: #{tpu_custom_call.1} parent=1 // pred_check_branch
      %25 = sbr.rel (0) target = $region25
    $region24: #{tpu_custom_call.1} parent=1 // pred_region
      _
    $region25: #{tpu_custom_call.1} parent=1 // pred_fallthru
      _
    // Predicated region
    $region26: #{tpu_custom_call.1} parent=1 // pred_check
      _
    $region27: #{tpu_custom_call.1} parent=1 // pred_check_branch
      %27 = sbr.rel (0) target = $region29
    $region28: #{tpu_custom_call.1} parent=1 // pred_region
      _
    $region29: #{tpu_custom_call.1} parent=1 // pred_fallthru
      _
    // Predicated region
    $region30: #{tpu_custom_call.1} parent=1 // pred_check
      _
    $region31: #{tpu_custom_call.1} parent=1 // pred_check_branch
      %29 = sbr.rel (0) target = $region33
    $region32: #{tpu_custom_call.1} parent=1 // pred_region
      _
    $region33: #{tpu_custom_call.1} parent=1 // pred_fallthru
      _
    %v31 = vld [vmem:[%s3] sm:$0xff]
    %v32 = vld [vmem:[%s5] sm:$0xf]
    %v33 = vld [vmem:[%s5 + $0x4] sm:$0xf]
    %v34 = vld [vmem:[%s5 + $0x8] sm:$0xf]
    %v35 = vld [vmem:[%s5 + $0xc] sm:$0xf]
    %v36 = vld [vmem:[%s7] sm:$0x1]
    %v37 = vld [vmem:[%s2] sm:$0xff]
    %v38 = vpack.c.bf16 %v37, %v37
    %v43 = vunpack.c.l.b16 %v32
    %v44 = vunpack.c.l.b16 %v33
    %v45 = vunpack.c.l.b16 %v34
    %v46 = vunpack.c.l.b16 %v35
    %v47 = vpack.c.b16 %v44, %v43
    %v48 = vpack.c.b16 %v46, %v45
    %vm51 = vcmask 261120
    %v53 = vsel %vm51, %v38, 0
    %55 = vmatpush.bf16.msra.mxu0 0
    %56 = vmatpush.bf16.msra.mxu0 0
    %57 = vmatpush.bf16.msra.mxu0 0
    %58 = vmatpush.bf16.msra.mxu0 0
    %59 = vmatpush.bf16.msra.mxu0 0
    %60 = vmatpush.bf16.msra.mxu0 0
    %61 = vmatpush.bf16.msra.mxu0 %v48
    %62 = vmatpush.bf16.msra.mxu0 %v47
    %63 = vmatmul.bf16.gmra.mxu0 %v53
    %v64 = vpop.f32.mrf.mxu0
    %v65 = vadd.f32 0.0, %v64
    %v66 = vpop.f32.mrf.mxu0
    %67 = vdwg.mxu0
    %69 = vset.pattern.permute.xlu0 0
    %70 = vperm.xlu0 %69, %v31
    %v71 = vpop.permute.xlu0 %70
    %v73 = vmul.f32 %v71, %v65
    %v74 = vld [vmem:[%s0] sm:$0xf]
    %v75 = vpack.c.bf16 %v73, %v73
    %vm76 = vcmask 64512
    %v78 = vsel %vm76, %v74, 0
    %vm80 = vcmask 1043456
    %v82 = vsel %vm80, %v75, 0
    %84 = vmatpush.bf16.msra.mxu0 0
    %85 = vmatpush.bf16.msra.mxu0 0
    %86 = vmatpush.bf16.msra.mxu0 0
    %87 = vmatpush.bf16.msra.mxu0 0
    %88 = vmatpush.bf16.msra.mxu0 0
    %89 = vmatpush.bf16.msra.mxu0 0
    %90 = vmatpush.bf16.msra.mxu0 0
    %91 = vmatpush.bf16.msra.mxu0 %v82
    %92 = vmatmul.bf16.gmra.mxu0 %v78
    %v93 = vpop.f32.mrf.mxu0
    %v94 = vadd.f32 %v73, %v93
    %v95 = vpop.f32.mrf.mxu0
    %96 = vdwg.mxu0
    %v97 = vmul.f32 %v71, %v94
    %v98 = vperm.slane %v36, 0
    %v99 = vadd.f32 %v97, %v98
    %100 = vst.msk [vmem:[#allocation2] sm:$0xff] %vm51, %v99
    %v101 = vld [vmem:[#allocation2] ss:$4 sm:$0x3]
    %v102 = vld [vmem:[%s6] sm:$0xf]
    %v103 = vld [vmem:[%s6 + $0x4] sm:$0xf]
    %v104 = vld [vmem:[%s6 + $0x8] sm:$0xf]
    %v105 = vld [vmem:[%s6 + $0xc] sm:$0xf]
    %v106 = vpack.c.bf16 %v101, %v101
    %s107 = scalar_lea.vmem [#allocation2], 1
    %v108 = vld [vmem:[%s107] ss:$4 sm:$0x3]
    %v109 = vld [vmem:[%s6 + $0x10] sm:$0xf]
    %v110 = vld [vmem:[%s6 + $0x14] sm:$0xf]
    %v111 = vld [vmem:[%s6 + $0x18] sm:$0xf]
    %v112 = vld [vmem:[%s6 + $0x1c] sm:$0xf]
    %v113 = vpack.c.bf16 %v108, %v108
    %v118 = vunpack.c.l.b16 %v109
    %v119 = vunpack.c.l.b16 %v110
    %v120 = vunpack.c.l.b16 %v111
    %v121 = vunpack.c.l.b16 %v112
    %v122 = vpack.c.b16 %v119, %v118
    %v123 = vpack.c.b16 %v121, %v120
    %v127 = vsel %vm51, %v113, 0
    %129 = vmatpush.bf16.msra.mxu0 0
    %130 = vmatpush.bf16.msra.mxu0 0
    %131 = vmatpush.bf16.msra.mxu0 0
    %132 = vmatpush.bf16.msra.mxu0 0
    %133 = vmatpush.bf16.msra.mxu0 0
    %134 = vmatpush.bf16.msra.mxu0 0
    %135 = vmatpush.bf16.msra.mxu0 %v123
    %136 = vmatpush.bf16.msra.mxu0 %v122
    %137 = vmatmul.bf16.gmra.mxu0 %v127
    %v138 = vpop.f32.mrf.mxu0
    %v139 = vadd.f32 0.0, %v138
    %v140 = vpop.f32.mrf.mxu0
    %141 = vdwg.mxu0
    %v146 = vunpack.c.l.b16 %v102
    %v147 = vunpack.c.l.b16 %v103
    %v148 = vunpack.c.l.b16 %v104
    %v149 = vunpack.c.l.b16 %v105
    %v150 = vpack.c.b16 %v147, %v146
    %v151 = vpack.c.b16 %v149, %v148
    %v155 = vsel %vm51, %v106, 0
    %157 = vmatpush.bf16.msra.mxu0 0
    %158 = vmatpush.bf16.msra.mxu0 0
    %159 = vmatpush.bf16.msra.mxu0 0
    %160 = vmatpush.bf16.msra.mxu0 0
    %161 = vmatpush.bf16.msra.mxu0 0
    %162 = vmatpush.bf16.msra.mxu0 0
    %163 = vmatpush.bf16.msra.mxu0 %v151
    %164 = vmatpush.bf16.msra.mxu0 %v150
    %165 = vmatmul.bf16.gmra.mxu0 %v155
    %v166 = vpop.f32.mrf.mxu0
    %v167 = vadd.f32 %v139, %v166
    %v168 = vpop.f32.mrf.mxu0
    %169 = vdwg.mxu0
    %v170 = vld [vmem:[%s7 + $0x2] sm:$0x1]
    %v171 = vperm.slane %v170, 0
    %v172 = vadd.f32 %v167, %v171
    %vm173 = vcmask 254976
    %174 = vst.msk [vmem:[#allocation3] sm:$0x3] %vm173, %v172
    %s175 = scalar_lea.vmem [#allocation2], 2
    %v176 = vld [vmem:[%s175] ss:$4 sm:$0x3]
    %v177 = vld [vmem:[%s6 + $0x20] sm:$0xf]
    %v178 = vld [vmem:[%s6 + $0x24] sm:$0xf]
    %v179 = vld [vmem:[%s6 + $0x28] sm:$0xf]
    %v180 = vld [vmem:[%s6 + $0x2c] sm:$0xf]
    %v181 = vpack.c.bf16 %v176, %v176
    %s182 = scalar_lea.vmem [#allocation2], 3
    %v183 = vld [vmem:[%s182] ss:$4 sm:$0x3]
    %v184 = vld [vmem:[%s6 + $0x30] sm:$0xf]
    %v185 = vld [vmem:[%s6 + $0x34] sm:$0xf]
    %v186 = vld [vmem:[%s6 + $0x38] sm:$0xf]
    %v187 = vld [vmem:[%s6 + $0x3c] sm:$0xf]
    %v188 = vpack.c.bf16 %v183, %v183
    %v193 = vunpack.c.l.b16 %v184
    %v194 = vunpack.c.l.b16 %v185
    %v195 = vunpack.c.l.b16 %v186
    %v196 = vunpack.c.l.b16 %v187
    %v197 = vpack.c.b16 %v194, %v193
    %v198 = vpack.c.b16 %v196, %v195
    %v202 = vsel %vm51, %v188, 0
    %204 = vmatpush.bf16.msra.mxu0 0
    %205 = vmatpush.bf16.msra.mxu0 0
    %206 = vmatpush.bf16.msra.mxu0 0
    %207 = vmatpush.bf16.msra.mxu0 0
    %208 = vmatpush.bf16.msra.mxu0 0
    %209 = vmatpush.bf16.msra.mxu0 0
    %210 = vmatpush.bf16.msra.mxu0 %v198
    %211 = vmatpush.bf16.msra.mxu0 %v197
    %212 = vmatmul.bf16.gmra.mxu0 %v202
    %v213 = vpop.f32.mrf.mxu0
    %v214 = vadd.f32 0.0, %v213
    %v215 = vpop.f32.mrf.mxu0
    %216 = vdwg.mxu0
    %v221 = vunpack.c.l.b16 %v177
    %v222 = vunpack.c.l.b16 %v178
    %v223 = vunpack.c.l.b16 %v179
    %v224 = vunpack.c.l.b16 %v180
    %v225 = vpack.c.b16 %v222, %v221
    %v226 = vpack.c.b16 %v224, %v223
    %v230 = vsel %vm51, %v181, 0
    %232 = vmatpush.bf16.msra.mxu0 0
    %233 = vmatpush.bf16.msra.mxu0 0
    %234 = vmatpush.bf16.msra.mxu0 0
    %235 = vmatpush.bf16.msra.mxu0 0
    %236 = vmatpush.bf16.msra.mxu0 0
    %237 = vmatpush.bf16.msra.mxu0 0
    %238 = vmatpush.bf16.msra.mxu0 %v226
    %239 = vmatpush.bf16.msra.mxu0 %v225
    %240 = vmatmul.bf16.gmra.mxu0 %v230
    %v241 = vpop.f32.mrf.mxu0
    %v242 = vadd.f32 %v214, %v241
    %v243 = vpop.f32.mrf.mxu0
    %244 = vdwg.mxu0
    %v245 = vld [vmem:[%s7 + $0x3] sm:$0x1]
    %v246 = vperm.slane %v245, 0
    %v247 = vadd.f32 %v242, %v246
    %248 = vst.msk [vmem:[#allocation3 + $0x2] sm:$0x3] %vm173, %v247
    %v249 = vld [vmem:[#allocation3] ss:$2 sm:$0x3]
    %s250 = scalar_lea.vmem [#allocation3], 1
    %v251 = vld [vmem:[%s250] ss:$2 sm:$0x3]
    %v253 = vrot.slane %v251, 6
    %vm255 = vcmask 1041408
    %v256 = vsel %vm255, %v249, %v253
    %v257 = vld [vmem:[%s4] sm:$0xf]
    %v258 = vld [vmem:[%s5 + $0x10] sm:$0xf]
    %v259 = vld [vmem:[%s5 + $0x14] sm:$0xf]
    %v260 = vld [vmem:[%s5 + $0x18] sm:$0xf]
    %v261 = vld [vmem:[%s5 + $0x1c] sm:$0xf]
    %v262 = vld [vmem:[%s7 + $0x1] sm:$0x1]
    %v263 = vpack.c.bf16 %v256, %v256
    %v268 = vunpack.c.l.b16 %v258
    %v269 = vunpack.c.l.b16 %v259
    %v270 = vunpack.c.l.b16 %v260
    %v271 = vunpack.c.l.b16 %v261
    %v272 = vpack.c.b16 %v269, %v268
    %v273 = vpack.c.b16 %v271, %v270
    %v277 = vsel %vm51, %v263, 0
    %279 = vmatpush.bf16.msra.mxu0 0
    %280 = vmatpush.bf16.msra.mxu0 0
    %281 = vmatpush.bf16.msra.mxu0 0
    %282 = vmatpush.bf16.msra.mxu0 0
    %283 = vmatpush.bf16.msra.mxu0 0
    %284 = vmatpush.bf16.msra.mxu0 0
    %285 = vmatpush.bf16.msra.mxu0 %v273
    %286 = vmatpush.bf16.msra.mxu0 %v272
    %287 = vmatmul.bf16.gmra.mxu0 %v277
    %v288 = vpop.f32.mrf.mxu0
    %v289 = vadd.f32 0.0, %v288
    %v290 = vpop.f32.mrf.mxu0
    %291 = vdwg.mxu0
    %293 = vset.pattern.permute.xlu0 0
    %294 = vperm.xlu0 %293, %v257
    %v295 = vpop.permute.xlu0 %294
    %v297 = vmul.f32 %v295, %v289
    %v298 = vld [vmem:[%s1] sm:$0x3]
    %v299 = vpack.c.bf16 %v297, %v297
    %vm300 = vcmask 31744
    %v302 = vsel %vm300, %v298, 0
    %v305 = vsel %vm255, %v299, 0
    %307 = vmatpush.bf16.msra.mxu0 0
    %308 = vmatpush.bf16.msra.mxu0 0
    %309 = vmatpush.bf16.msra.mxu0 0
    %310 = vmatpush.bf16.msra.mxu0 0
    %311 = vmatpush.bf16.msra.mxu0 0
    %312 = vmatpush.bf16.msra.mxu0 0
    %313 = vmatpush.bf16.msra.mxu0 0
    %314 = vmatpush.bf16.msra.mxu0 %v305
    %315 = vmatmul.bf16.gmra.mxu0 %v302
    %v316 = vpop.f32.mrf.mxu0
    %v317 = vadd.f32 %v297, %v316
    %v318 = vpop.f32.mrf.mxu0
    %319 = vdwg.mxu0
    %v320 = vmul.f32 %v295, %v317
    %v321 = vperm.slane %v262, 0
    %v322 = vadd.f32 %v320, %v321
    %vm323 = vcmask 257024
    %324 = vst.msk [vmem:[#allocation4] sm:$0xf] %vm323, %v322
    // Predicated region
    $region34: #{tpu_custom_call.1} parent=1 // pred_check
      _
    $region35: #{tpu_custom_call.1} parent=1 // pred_check_branch
      %326 = sbr.rel (0) target = $region37
    $region36: #{tpu_custom_call.1} parent=1 // pred_region
      %328 = vsyncadd [#allocation5], 0
      %s330 = sshll.u32 [#allocation4], 4
      %s331 = int_to_ptr.vmem [resolvable:$true] %s330
      %s332 = sshll.u32 %s8, 4
      %s333 = int_to_ptr.hbm [resolvable:$true] %s332
      %335 = dma.vmem_to_hbm [thread:$0]  %s331, 64, %s333, [#allocation5]
    $region37: #{tpu_custom_call.1} parent=1 // pred_fallthru
      _
    // Predicated region
    $region38: #{tpu_custom_call.1} parent=1 // pred_check
      _
    $region39: #{tpu_custom_call.1} parent=1 // pred_check_branch
      %337 = sbr.rel (0) target = $region41
    $region40: #{tpu_custom_call.1} parent=1 // pred_region
      %339 = dma.done [#allocation5], 64
    $region41: #{tpu_custom_call.1} parent=1 // pred_fallthru
      _
    %340 = vsyncpa [#allocation5], 1

</llo_original>
